<compile_context>
chip_gen: v7x
topology: tpu7x:2x2x1
jax: 0.10.0
libtpu: 0.0.40
codegen_flags: <defaults>
</compile_context>

<pallas_src>
import functools

import jax
import jax.numpy as jnp
from jax.experimental import pallas as pl
from jax.experimental.pallas import tpu as pltpu


def _round_up(x, m):
    return ((x + m - 1) // m) * m


# ----------------------------- Fused Pallas kernel ----------------------------- #

_UNROLL_T = 8  # statically unroll the time loop up to this many steps


def _make_fused_kernel(num_layers, T, Hp):
    """Builds the fused GRU + FC + softmax kernel for static layer/time counts."""

    def kernel(*refs):
        x_ref = refs[0]                                   # (T, bb, Dp) bf16
        layer_refs = refs[1:1 + 5 * num_layers]           # per layer: wih, whh, b_rz, b_ihn, b_hhn
        wfc_ref, bfc_ref, g_ref, out_ref, h_ref = refs[1 + 5 * num_layers:]

        def layer_step(l, inp_bf16, h_prev):
            """One GRU cell.  h_prev=None means h_prev == 0 (skip the W_hh path)."""
            wih, whh, b_rz, b_ihn, b_hhn = layer_refs[5 * l:5 * l + 5]
            # MXU matmul: bf16 operands, f32 accumulation.
            gi = jnp.dot(inp_bf16, wih[...], preferred_element_type=jnp.float32)
            if h_prev is None:
                # h_prev == 0  =>  gh == 0 : one matmul + no blend with h_prev.
                rz = jax.nn.sigmoid(gi[:, :2 * Hp] + b_rz[...])
                r = rz[:, :Hp]
                z = rz[:, Hp:]
                n = jnp.tanh(gi[:, 2 * Hp:] + b_ihn[...] + r * b_hhn[...])
                return (1.0 - z) * n
            gh = jnp.dot(h_prev.astype(jnp.bfloat16), whh[...],
                         preferred_element_type=jnp.float32)
            rz = jax.nn.sigmoid(gi[:, :2 * Hp] + gh[:, :2 * Hp] + b_rz[...])
            r = rz[:, :Hp]
            z = rz[:, Hp:]
            hn = gh[:, 2 * Hp:] + b_hhn[...]
            n = jnp.tanh(gi[:, 2 * Hp:] + b_ihn[...] + r * hn)
            return (1.0 - z) * n + z * h_prev             # f32 blend

        if T <= _UNROLL_T:
            # Fully static unroll: hidden state lives in vregs, never touches scratch.
            h_list = [None] * num_layers
            for t in range(T):
                inp = x_ref[t]                            # (bb, Dp/Hp) bf16
                for l in range(num_layers):
                    h_new = layer_step(l, inp, h_list[l])
                    h_list[l] = h_new
                    inp = h_new.astype(jnp.bfloat16)
            h_last = h_list[num_layers - 1]               # (bb, Hp) f32
        else:
            # t = 0 with the zero-hidden fast path; seed the VMEM hidden-state scratch.
            inp = x_ref[0]
            for l in range(num_layers):
                h_new = layer_step(l, inp, None)
                h_ref[l] = h_new
                inp = h_new.astype(jnp.bfloat16)

            def time_step(t, carry):
                inp = x_ref[t]
                for l in range(num_layers):
                    h_new = layer_step(l, inp, h_ref[l])
                    h_ref[l] = h_new
                    inp = h_new.astype(jnp.bfloat16)
                return carry

            jax.lax.fori_loop(1, T, time_step, 0)
            h_last = h_ref[num_layers - 1]

        # ---- FC + segmented softmax, VMEM-resident, lane-dense output ---- #
        logits = jnp.dot(h_last.astype(jnp.bfloat16), wfc_ref[...],
                         preferred_element_type=jnp.float32) + bfc_ref[...]
        # Row max is a per-row constant shift -> identical softmax per vocab group,
        # avoids any misaligned per-group slicing/reshape.
        m = jnp.max(logits, axis=-1, keepdims=True)
        e = jnp.exp(logits - m)
        # Segmented (per vocab-group) sum via a block-diagonal ones matmul on the MXU.
        seg = jnp.dot(e, g_ref[...], preferred_element_type=jnp.float32)
        inv = pl.reciprocal(seg, approx=True)             # EUP vrcp
        inv = inv * (2.0 - seg * inv)                     # one Newton step -> f32 accuracy
        out_ref[...] = e * inv                            # lane-dense (bb, Lp) store

    return kernel


# ------------------------------- Parameter setup ------------------------------- #

def init_params(key, noise_dim, hidden_dim, num_layers, max_length, vocab_size):
    """Raw f32 parameters in PyTorch layout (uniform(-k, k) init like nn.GRU / nn.Linear)."""
    params = {"gru": []}
    k_gru = 1.0 / jnp.sqrt(hidden_dim)
    for layer in range(num_layers):
        in_dim = noise_dim if layer == 0 else hidden_dim
        key, k1, k2, k3, k4 = jax.random.split(key, 5)
        params["gru"].append({
            "w_ih": jax.random.uniform(k1, (3 * hidden_dim, in_dim), jnp.float32, -k_gru, k_gru),
            "w_hh": jax.random.uniform(k2, (3 * hidden_dim, hidden_dim), jnp.float32, -k_gru, k_gru),
            "b_ih": jax.random.uniform(k3, (3 * hidden_dim,), jnp.float32, -k_gru, k_gru),
            "b_hh": jax.random.uniform(k4, (3 * hidden_dim,), jnp.float32, -k_gru, k_gru),
        })
    k_fc = 1.0 / jnp.sqrt(hidden_dim)
    key, k1, k2 = jax.random.split(key, 3)
    L = max_length * vocab_size
    params["fc_w"] = jax.random.uniform(k1, (L, hidden_dim), jnp.float32, -k_fc, k_fc)
    params["fc_b"] = jax.random.uniform(k2, (L,), jnp.float32, -k_fc, k_fc)
    return params


def pack_params(raw, noise_dim, hidden_dim, num_layers, max_length, vocab_size):
    """Pad gates to 128-lane boundaries, pre-transpose, fold r/z biases, cast matmul weights to bf16."""
    H = hidden_dim
    Hp = _round_up(H, 128)
    Dp = _round_up(noise_dim, 128)
    L = max_length * vocab_size
    Lp = _round_up(L, 128)

    packed = {"gru": []}
    for l in range(num_layers):
        p = raw["gru"][l]
        din = noise_dim if l == 0 else H
        dinp = Dp if l == 0 else Hp
        wih_t = jnp.zeros((dinp, 3 * Hp), jnp.float32)
        whh_t = jnp.zeros((Hp, 3 * Hp), jnp.float32)
        for g in range(3):
            wih_t = wih_t.at[:din, g * Hp:g * Hp + H].set(p["w_ih"][g * H:(g + 1) * H, :].T)
            whh_t = whh_t.at[:H, g * Hp:g * Hp + H].set(p["w_hh"][g * H:(g + 1) * H, :].T)
        b_rz = jnp.zeros((1, 2 * Hp), jnp.float32)
        b_rz = b_rz.at[0, 0:H].set(p["b_ih"][0:H] + p["b_hh"][0:H])
        b_rz = b_rz.at[0, Hp:Hp + H].set(p["b_ih"][H:2 * H] + p["b_hh"][H:2 * H])
        b_ihn = jnp.zeros((1, Hp), jnp.float32).at[0, :H].set(p["b_ih"][2 * H:3 * H])
        b_hhn = jnp.zeros((1, Hp), jnp.float32).at[0, :H].set(p["b_hh"][2 * H:3 * H])
        packed["gru"].append({
            "wih_t": wih_t.astype(jnp.bfloat16),
            "whh_t": whh_t.astype(jnp.bfloat16),
            "b_rz": b_rz, "b_ihn": b_ihn, "b_hhn": b_hhn,
        })

    wfc_t = jnp.zeros((Hp, Lp), jnp.float32).at[:H, :L].set(raw["fc_w"].T)
    bfc = jnp.zeros((1, Lp), jnp.float32).at[0, :L].set(raw["fc_b"])

    # Block-diagonal group-indicator matrix for the segmented softmax sum
    # (identity on padded lanes so they stay finite and are simply sliced off later).
    lane = jnp.arange(Lp)
    real = lane < L
    grp = lane // vocab_size
    same = (grp[:, None] == grp[None, :]) & real[:, None] & real[None, :]
    ident_pad = (lane[:, None] == lane[None, :]) & (~real[:, None])
    G = (same | ident_pad).astype(jnp.float32)

    packed["fc"] = {"w_t": wfc_t.astype(jnp.bfloat16), "b": bfc, "G": G}
    return packed


# ------------------------------ Forward (Pallas) ------------------------------- #

@functools.partial(jax.jit, static_argnames=("hidden_dim", "num_layers",
                                             "max_length", "vocab_size"))
def gru_generator_forward(x, packed, *, hidden_dim, num_layers, max_length, vocab_size):
    if x.ndim == 2:
        x = x[:, None, :]                                 # (B, 1, noise_dim) -- unsqueeze(1)
    B, T, D = x.shape

    H = hidden_dim
    Hp = _round_up(H, 128)
    Dp = _round_up(D, 128)
    L = max_length * vocab_size
    Lp = _round_up(L, 128)

    # Batch padding / block size: >=2 blocks for moderate batches so v7x's 2 TCs share work.
    Bp8 = _round_up(B, 8)
    if Bp8 <= 8:
        bb = Bp8
    elif Bp8 <= 256:
        bb = _round_up(Bp8 // 2, 8)
    else:
        bb = 128
    Bp = _round_up(Bp8, bb)

    # x -> (T, Bp, Dp) bf16 (time on the leading axis so the kernel can index x_ref[t]).
    x_p = jnp.zeros((T, Bp, Dp), jnp.float32)
    x_p = x_p.at[:, :B, :D].set(jnp.transpose(x, (1, 0, 2))).astype(jnp.bfloat16)

    inputs = [x_p]
    in_specs = [pl.BlockSpec((T, bb, Dp), lambda i: (0, i, 0))]
    for l in range(num_layers):
        p = packed["gru"][l]
        for name in ("wih_t", "whh_t", "b_rz", "b_ihn", "b_hhn"):
            arr = p[name]
            inputs.append(arr)
            in_specs.append(pl.BlockSpec(arr.shape, lambda i: (0, 0)))
    for name in ("w_t", "b", "G"):
        arr = packed["fc"][name]
        inputs.append(arr)
        in_specs.append(pl.BlockSpec(arr.shape, lambda i: (0, 0)))

    kernel = _make_fused_kernel(num_layers, T, Hp)

    out = pl.pallas_call(
        kernel,
        out_shape=jax.ShapeDtypeStruct((Bp, Lp), jnp.float32),
        grid_spec=pltpu.PrefetchScalarGridSpec(
            num_scalar_prefetch=0,
            grid=(Bp // bb,),
            in_specs=in_specs,
            out_specs=pl.BlockSpec((bb, Lp), lambda i: (i, 0)),
            scratch_shapes=[pltpu.VMEM((num_layers, bb, Hp), jnp.float32)],
        ),
        compiler_params=pltpu.CompilerParams(
            dimension_semantics=("parallel",),
            vmem_limit_bytes=48 * 1024 * 1024,
        ),
    )(*inputs)

    # Lane-dense kernel output -> PyTorch shape.
    return out[:B, :L].reshape(B, max_length, vocab_size)


# ------------------------------ Pure-JAX reference ------------------------------ #

def reference_forward(x, raw, hidden_dim, num_layers, max_length, vocab_size):
    if x.ndim == 2:
        x = x[:, None, :]
    B, T, _ = x.shape
    h = [jnp.zeros((B, hidden_dim), jnp.float32) for _ in range(num_layers)]
    for t in range(T):
        inp = x[:, t, :]
        for l in range(num_layers):
            p = raw["gru"][l]
            gi = inp @ p["w_ih"].T + p["b_ih"]
            gh = h[l] @ p["w_hh"].T + p["b_hh"]
            i_r, i_z, i_n = jnp.split(gi, 3, axis=1)
            h_r, h_z, h_n = jnp.split(gh, 3, axis=1)
            r = jax.nn.sigmoid(i_r + h_r)
            z = jax.nn.sigmoid(i_z + h_z)
            n = jnp.tanh(i_n + r * h_n)
            h[l] = (1.0 - z) * n + z * h[l]
            inp = h[l]
    logits = h[-1] @ raw["fc_w"].T + raw["fc_b"]
    return jax.nn.softmax(logits.reshape(B, max_length, vocab_size), axis=2)


# ----------------------------------- Driver ------------------------------------ #

if __name__ == "__main__":
    noise_dim = 32
    hidden_dim = 32
    num_layers = 2
    max_length = 8
    vocab_size = 16
    batch = 4          # wrapper pads batch to a multiple of 8 internally

    key = jax.random.PRNGKey(0)
    key, pkey, xkey = jax.random.split(key, 3)

    raw = init_params(pkey, noise_dim, hidden_dim, num_layers, max_length, vocab_size)
    packed = pack_params(raw, noise_dim, hidden_dim, num_layers, max_length, vocab_size)
    x = jax.random.normal(xkey, (batch, noise_dim), jnp.float32)   # noise input

    out = gru_generator_forward(
        x, packed,
        hidden_dim=hidden_dim, num_layers=num_layers,
        max_length=max_length, vocab_size=vocab_size)
    out = jax.block_until_ready(out)

    assert out.shape == (batch, max_length, vocab_size)
    # softmax rows sum to 1
    assert bool(jnp.allclose(jnp.sum(out, axis=2), 1.0, atol=1e-3))
    # matches the pure-f32 reference (bf16 matmuls -> relaxed tolerance)
    ref = reference_forward(x, raw, hidden_dim, num_layers, max_length, vocab_size)
    assert bool(jnp.allclose(out, ref, atol=5e-3)), float(jnp.max(jnp.abs(out - ref)))

    print("KERNEL_OK")
</pallas_src>

<mosaic_0001>
module attributes {stable_mosaic.version = 11 : i64} {
  func.func @kernel(%arg0: i32, %arg1: memref<1x8x128xbf16, #tpu.memory_space<vmem>>, %arg2: memref<128x384xbf16, #tpu.memory_space<vmem>>, %arg3: memref<128x384xbf16, #tpu.memory_space<vmem>>, %arg4: memref<1x256xf32, #tpu.memory_space<vmem>>, %arg5: memref<1x128xf32, #tpu.memory_space<vmem>>, %arg6: memref<1x128xf32, #tpu.memory_space<vmem>>, %arg7: memref<128x384xbf16, #tpu.memory_space<vmem>>, %arg8: memref<128x384xbf16, #tpu.memory_space<vmem>>, %arg9: memref<1x256xf32, #tpu.memory_space<vmem>>, %arg10: memref<1x128xf32, #tpu.memory_space<vmem>>, %arg11: memref<1x128xf32, #tpu.memory_space<vmem>>, %arg12: memref<128x128xbf16, #tpu.memory_space<vmem>>, %arg13: memref<1x128xf32, #tpu.memory_space<vmem>>, %arg14: memref<128x128xf32, #tpu.memory_space<vmem>>, %arg15: memref<8x128xf32, #tpu.memory_space<vmem>>, %arg16: memref<2x8x128xf32, #tpu.memory_space<vmem>>) attributes {dimension_semantics = [#tpu.dimension_semantics<parallel>], iteration_bounds = array<i64: 1>, scalar_prefetch = 0 : i64, scratch_operands = 1 : i64, tpu.core_type = #tpu.core_type<tc>, window_params = [{transform_indices = @transform_0, window_bounds = array<i64: 1, 8, 128>}, {pipeline_mode = #tpu.pipeline_mode<synchronous>, transform_indices = @transform_1, window_bounds = array<i64: 128, 384>}, {pipeline_mode = #tpu.pipeline_mode<synchronous>, transform_indices = @transform_2, window_bounds = array<i64: 128, 384>}, {pipeline_mode = #tpu.pipeline_mode<synchronous>, transform_indices = @transform_3, window_bounds = array<i64: 1, 256>}, {pipeline_mode = #tpu.pipeline_mode<synchronous>, transform_indices = @transform_4, window_bounds = array<i64: 1, 128>}, {pipeline_mode = #tpu.pipeline_mode<synchronous>, transform_indices = @transform_5, window_bounds = array<i64: 1, 128>}, {pipeline_mode = #tpu.pipeline_mode<synchronous>, transform_indices = @transform_6, window_bounds = array<i64: 128, 384>}, {pipeline_mode = #tpu.pipeline_mode<synchronous>, transform_indices = @transform_7, window_bounds = array<i64: 128, 384>}, {pipeline_mode = #tpu.pipeline_mode<synchronous>, transform_indices = @transform_8, window_bounds = array<i64: 1, 256>}, {pipeline_mode = #tpu.pipeline_mode<synchronous>, transform_indices = @transform_9, window_bounds = array<i64: 1, 128>}, {pipeline_mode = #tpu.pipeline_mode<synchronous>, transform_indices = @transform_10, window_bounds = array<i64: 1, 128>}, {pipeline_mode = #tpu.pipeline_mode<synchronous>, transform_indices = @transform_11, window_bounds = array<i64: 128, 128>}, {pipeline_mode = #tpu.pipeline_mode<synchronous>, transform_indices = @transform_12, window_bounds = array<i64: 1, 128>}, {pipeline_mode = #tpu.pipeline_mode<synchronous>, transform_indices = @transform_13, window_bounds = array<i64: 128, 128>}, {transform_indices = @transform_14, window_bounds = array<i64: 8, 128>}]} {
    %c0 = arith.constant 0 : index
    %c0_0 = arith.constant 0 : index
    %c0_1 = arith.constant 0 : index
    %0 = vector.load %arg1[%c0, %c0_0, %c0_1] : memref<1x8x128xbf16, #tpu.memory_space<vmem>>, vector<1x8x128xbf16>
    %1 = vector.shape_cast %0 : vector<1x8x128xbf16> to vector<8x128xbf16>
    %c0_2 = arith.constant 0 : index
    %c0_3 = arith.constant 0 : index
    %2 = vector.load %arg2[%c0_2, %c0_3] : memref<128x384xbf16, #tpu.memory_space<vmem>>, vector<128x384xbf16>
    %cst = arith.constant dense<0.000000e+00> : vector<8x384xf32>
    %3 = tpu.matmul %1, %2, %cst {dimension_numbers = #tpu.dot_dimension_numbers<[1], [0], [0], [1], [0, 0, 1, 1], [], []>} : vector<8x128xbf16>, vector<128x384xbf16>, vector<8x384xf32> -> vector<8x384xf32>
    %4 = vector.extract_strided_slice %3 {offsets = [0, 0], sizes = [8, 256], strides = [1, 1]} : vector<8x384xf32> to vector<8x256xf32>
    %c0_4 = arith.constant 0 : index
    %c0_5 = arith.constant 0 : index
    %5 = vector.load %arg4[%c0_4, %c0_5] : memref<1x256xf32, #tpu.memory_space<vmem>>, vector<1x256xf32>
    %6 = vector.broadcast %5 : vector<1x256xf32> to vector<8x256xf32>
    %7 = arith.addf %4, %6 : vector<8x256xf32>
    %8 = arith.negf %7 : vector<8x256xf32>
    %9 = math.exp %8 : vector<8x256xf32>
    %cst_6 = arith.constant 1.000000e+00 : f32
    %10 = vector.broadcast %cst_6 : f32 to vector<8x256xf32>
    %11 = arith.addf %10, %9 : vector<8x256xf32>
    %12 = arith.divf %10, %11 : vector<8x256xf32>
    %13 = vector.extract_strided_slice %12 {offsets = [0, 0], sizes = [8, 128], strides = [1, 1]} : vector<8x256xf32> to vector<8x128xf32>
    %14 = vector.extract_strided_slice %12 {offsets = [0, 128], sizes = [8, 128], strides = [1, 1]} : vector<8x256xf32> to vector<8x128xf32>
    %15 = vector.extract_strided_slice %3 {offsets = [0, 256], sizes = [8, 128], strides = [1, 1]} : vector<8x384xf32> to vector<8x128xf32>
    %c0_7 = arith.constant 0 : index
    %c0_8 = arith.constant 0 : index
    %16 = vector.load %arg5[%c0_7, %c0_8] : memref<1x128xf32, #tpu.memory_space<vmem>>, vector<1x128xf32>
    %17 = vector.broadcast %16 : vector<1x128xf32> to vector<8x128xf32>
    %18 = arith.addf %15, %17 : vector<8x128xf32>
    %c0_9 = arith.constant 0 : index
    %c0_10 = arith.constant 0 : index
    %19 = vector.load %arg6[%c0_9, %c0_10] : memref<1x128xf32, #tpu.memory_space<vmem>>, vector<1x128xf32>
    %20 = vector.broadcast %19 : vector<1x128xf32> to vector<8x128xf32>
    %21 = arith.mulf %13, %20 : vector<8x128xf32>
    %22 = arith.addf %18, %21 : vector<8x128xf32>
    %23 = math.tanh %22 : vector<8x128xf32>
    %cst_11 = arith.constant 1.000000e+00 : f32
    %24 = vector.broadcast %cst_11 : f32 to vector<8x128xf32>
    %25 = arith.subf %24, %14 : vector<8x128xf32>
    %26 = arith.mulf %25, %23 : vector<8x128xf32>
    %27 = arith.truncf %26 : vector<8x128xf32> to vector<8x128xbf16>
    %c0_12 = arith.constant 0 : index
    %c0_13 = arith.constant 0 : index
    %28 = vector.load %arg7[%c0_12, %c0_13] : memref<128x384xbf16, #tpu.memory_space<vmem>>, vector<128x384xbf16>
    %cst_14 = arith.constant dense<0.000000e+00> : vector<8x384xf32>
    %29 = tpu.matmul %27, %28, %cst_14 {dimension_numbers = #tpu.dot_dimension_numbers<[1], [0], [0], [1], [0, 0, 1, 1], [], []>} : vector<8x128xbf16>, vector<128x384xbf16>, vector<8x384xf32> -> vector<8x384xf32>
    %30 = vector.extract_strided_slice %29 {offsets = [0, 0], sizes = [8, 256], strides = [1, 1]} : vector<8x384xf32> to vector<8x256xf32>
    %c0_15 = arith.constant 0 : index
    %c0_16 = arith.constant 0 : index
    %31 = vector.load %arg9[%c0_15, %c0_16] : memref<1x256xf32, #tpu.memory_space<vmem>>, vector<1x256xf32>
    %32 = vector.broadcast %31 : vector<1x256xf32> to vector<8x256xf32>
    %33 = arith.addf %30, %32 : vector<8x256xf32>
    %34 = arith.negf %33 : vector<8x256xf32>
    %35 = math.exp %34 : vector<8x256xf32>
    %cst_17 = arith.constant 1.000000e+00 : f32
    %36 = vector.broadcast %cst_17 : f32 to vector<8x256xf32>
    %37 = arith.addf %36, %35 : vector<8x256xf32>
    %38 = arith.divf %36, %37 : vector<8x256xf32>
    %39 = vector.extract_strided_slice %38 {offsets = [0, 0], sizes = [8, 128], strides = [1, 1]} : vector<8x256xf32> to vector<8x128xf32>
    %40 = vector.extract_strided_slice %38 {offsets = [0, 128], sizes = [8, 128], strides = [1, 1]} : vector<8x256xf32> to vector<8x128xf32>
    %41 = vector.extract_strided_slice %29 {offsets = [0, 256], sizes = [8, 128], strides = [1, 1]} : vector<8x384xf32> to vector<8x128xf32>
    %c0_18 = arith.constant 0 : index
    %c0_19 = arith.constant 0 : index
    %42 = vector.load %arg10[%c0_18, %c0_19] : memref<1x128xf32, #tpu.memory_space<vmem>>, vector<1x128xf32>
    %43 = vector.broadcast %42 : vector<1x128xf32> to vector<8x128xf32>
    %44 = arith.addf %41, %43 : vector<8x128xf32>
    %c0_20 = arith.constant 0 : index
    %c0_21 = arith.constant 0 : index
    %45 = vector.load %arg11[%c0_20, %c0_21] : memref<1x128xf32, #tpu.memory_space<vmem>>, vector<1x128xf32>
    %46 = vector.broadcast %45 : vector<1x128xf32> to vector<8x128xf32>
    %47 = arith.mulf %39, %46 : vector<8x128xf32>
    %48 = arith.addf %44, %47 : vector<8x128xf32>
    %49 = math.tanh %48 : vector<8x128xf32>
    %cst_22 = arith.constant 1.000000e+00 : f32
    %50 = vector.broadcast %cst_22 : f32 to vector<8x128xf32>
    %51 = arith.subf %50, %40 : vector<8x128xf32>
    %52 = arith.mulf %51, %49 : vector<8x128xf32>
    %53 = arith.truncf %52 : vector<8x128xf32> to vector<8x128xbf16>
    %c0_23 = arith.constant 0 : index
    %c0_24 = arith.constant 0 : index
    %54 = vector.load %arg12[%c0_23, %c0_24] : memref<128x128xbf16, #tpu.memory_space<vmem>>, vector<128x128xbf16>
    %cst_25 = arith.constant dense<0.000000e+00> : vector<8x128xf32>
    %55 = tpu.matmul %53, %54, %cst_25 {dimension_numbers = #tpu.dot_dimension_numbers<[1], [0], [0], [1], [0, 0, 1, 1], [], []>} : vector<8x128xbf16>, vector<128x128xbf16>, vector<8x128xf32> -> vector<8x128xf32>
    %c0_26 = arith.constant 0 : index
    %c0_27 = arith.constant 0 : index
    %56 = vector.load %arg13[%c0_26, %c0_27] : memref<1x128xf32, #tpu.memory_space<vmem>>, vector<1x128xf32>
    %57 = vector.broadcast %56 : vector<1x128xf32> to vector<8x128xf32>
    %58 = arith.addf %55, %57 : vector<8x128xf32>
    %cst_28 = arith.constant dense<0xFF800000> : vector<8xf32>
    %59 = vector.multi_reduction <maximumf>, %58, %cst_28 [1] : vector<8x128xf32> to vector<8xf32>
    %60 = vector.shape_cast %59 : vector<8xf32> to vector<8x1xf32>
    %61 = vector.broadcast %60 : vector<8x1xf32> to vector<8x128xf32>
    %62 = arith.subf %58, %61 : vector<8x128xf32>
    %63 = math.exp %62 : vector<8x128xf32>
    %c0_29 = arith.constant 0 : index
    %c0_30 = arith.constant 0 : index
    %64 = vector.load %arg14[%c0_29, %c0_30] : memref<128x128xf32, #tpu.memory_space<vmem>>, vector<128x128xf32>
    %cst_31 = arith.constant dense<0.000000e+00> : vector<8x128xf32>
    %65 = tpu.matmul %63, %64, %cst_31 {dimension_numbers = #tpu.dot_dimension_numbers<[1], [0], [0], [1], [0, 0, 1, 1], [], []>} : vector<8x128xf32>, vector<128x128xf32>, vector<8x128xf32> -> vector<8x128xf32>
    %66 = tpu.reciprocal %65 {approx = true} : vector<8x128xf32> -> vector<8x128xf32>
    %67 = arith.mulf %65, %66 : vector<8x128xf32>
    %cst_32 = arith.constant 2.000000e+00 : f32
    %68 = vector.broadcast %cst_32 : f32 to vector<8x128xf32>
    %69 = arith.subf %68, %67 : vector<8x128xf32>
    %70 = arith.mulf %66, %69 : vector<8x128xf32>
    %71 = arith.mulf %63, %70 : vector<8x128xf32>
    %c0_33 = arith.constant 0 : index
    %c0_34 = arith.constant 0 : index
    %72 = vector.load %arg15[%c0_33, %c0_34] : memref<8x128xf32, #tpu.memory_space<vmem>>, vector<8x128xf32>
    tpu.vector_store %arg15[%c0_33, %c0_34], %71 {strides = array<i32>} : memref<8x128xf32, #tpu.memory_space<vmem>>, vector<8x128xf32>,
    return
  }
  func.func @transform_0(%arg0: i32) -> (i32, i32, i32) {
    %c0_i32 = arith.constant 0 : i32
    %c0_i32_0 = arith.constant 0 : i32
    %c0_i32_1 = arith.constant 0 : i32
    return %c0_i32, %arg0, %c0_i32_0 : i32, i32, i32
  }
  func.func @transform_1(%arg0: i32) -> (i32, i32) {
    %c0_i32 = arith.constant 0 : i32
    %c0_i32_0 = arith.constant 0 : i32
    %c0_i32_1 = arith.constant 0 : i32
    return %c0_i32, %c0_i32_0 : i32, i32
  }
  func.func @transform_2(%arg0: i32) -> (i32, i32) {
    %c0_i32 = arith.constant 0 : i32
    %c0_i32_0 = arith.constant 0 : i32
    %c0_i32_1 = arith.constant 0 : i32
    return %c0_i32, %c0_i32_0 : i32, i32
  }
  func.func @transform_3(%arg0: i32) -> (i32, i32) {
    %c0_i32 = arith.constant 0 : i32
    %c0_i32_0 = arith.constant 0 : i32
    %c0_i32_1 = arith.constant 0 : i32
    return %c0_i32, %c0_i32_0 : i32, i32
  }
  func.func @transform_4(%arg0: i32) -> (i32, i32) {
    %c0_i32 = arith.constant 0 : i32
    %c0_i32_0 = arith.constant 0 : i32
    %c0_i32_1 = arith.constant 0 : i32
    return %c0_i32, %c0_i32_0 : i32, i32
  }
  func.func @transform_5(%arg0: i32) -> (i32, i32) {
    %c0_i32 = arith.constant 0 : i32
    %c0_i32_0 = arith.constant 0 : i32
    %c0_i32_1 = arith.constant 0 : i32
    return %c0_i32, %c0_i32_0 : i32, i32
  }
  func.func @transform_6(%arg0: i32) -> (i32, i32) {
    %c0_i32 = arith.constant 0 : i32
    %c0_i32_0 = arith.constant 0 : i32
    %c0_i32_1 = arith.constant 0 : i32
    return %c0_i32, %c0_i32_0 : i32, i32
  }
  func.func @transform_7(%arg0: i32) -> (i32, i32) {
    %c0_i32 = arith.constant 0 : i32
    %c0_i32_0 = arith.constant 0 : i32
    %c0_i32_1 = arith.constant 0 : i32
    return %c0_i32, %c0_i32_0 : i32, i32
  }
  func.func @transform_8(%arg0: i32) -> (i32, i32) {
    %c0_i32 = arith.constant 0 : i32
    %c0_i32_0 = arith.constant 0 : i32
    %c0_i32_1 = arith.constant 0 : i32
    return %c0_i32, %c0_i32_0 : i32, i32
  }
  func.func @transform_9(%arg0: i32) -> (i32, i32) {
    %c0_i32 = arith.constant 0 : i32
    %c0_i32_0 = arith.constant 0 : i32
    %c0_i32_1 = arith.constant 0 : i32
    return %c0_i32, %c0_i32_0 : i32, i32
  }
  func.func @transform_10(%arg0: i32) -> (i32, i32) {
    %c0_i32 = arith.constant 0 : i32
    %c0_i32_0 = arith.constant 0 : i32
    %c0_i32_1 = arith.constant 0 : i32
    return %c0_i32, %c0_i32_0 : i32, i32
  }
  func.func @transform_11(%arg0: i32) -> (i32, i32) {
    %c0_i32 = arith.constant 0 : i32
    %c0_i32_0 = arith.constant 0 : i32
    %c0_i32_1 = arith.constant 0 : i32
    return %c0_i32, %c0_i32_0 : i32, i32
  }
  func.func @transform_12(%arg0: i32) -> (i32, i32) {
    %c0_i32 = arith.constant 0 : i32
    %c0_i32_0 = arith.constant 0 : i32
    %c0_i32_1 = arith.constant 0 : i32
    return %c0_i32, %c0_i32_0 : i32, i32
  }
  func.func @transform_13(%arg0: i32) -> (i32, i32) {
    %c0_i32 = arith.constant 0 : i32
    %c0_i32_0 = arith.constant 0 : i32
    %c0_i32_1 = arith.constant 0 : i32
    return %c0_i32, %c0_i32_0 : i32, i32
  }
  func.func @transform_14(%arg0: i32) -> (i32, i32) {
    %c0_i32 = arith.constant 0 : i32
    %c0_i32_0 = arith.constant 0 : i32
    return %arg0, %c0_i32 : i32, i32
  }
}

</mosaic_0001>

<llo_original>
// kernel: gru_generator_forward.1
$region0: #{gru_generator_forward.1}
  #allocation0 [shape = 'u32[]', space=smem, size = 0x4, offset = 0x4, fixed_abs, tag = 'smem constant byte address 0x4 - core index']
  #allocation1 [shape = 'u32[144,128]{1,0:T(1,128)}', space=vmem, size = 0x12000, scoped, tag = 'internal scratch']
  #allocation2 [shape = 'f32[2,8,128]{2,1,0:T(8,128)}', space=vmem, size = 0x2000, scoped, tag = 'scratch operand']
  %s0 = inlined_call_operand.vmem [shape: bf16[1,8,128], index: 0, kind: input, shape index: {}]
  %s1 = inlined_call_operand.hbm [shape: bf16[128,384], index: 1, kind: input, shape index: {}]
  %s2 = inlined_call_operand.hbm [shape: bf16[128,384], index: 2, kind: input, shape index: {}]
  %s3 = inlined_call_operand.vmem [shape: f32[1,256], index: 3, kind: input, shape index: {}]
  %s4 = inlined_call_operand.vmem [shape: f32[1,128], index: 4, kind: input, shape index: {}]
  %s5 = inlined_call_operand.vmem [shape: f32[1,128], index: 5, kind: input, shape index: {}]
  %s6 = inlined_call_operand.hbm [shape: bf16[128,384], index: 6, kind: input, shape index: {}]
  %s7 = inlined_call_operand.hbm [shape: bf16[128,384], index: 7, kind: input, shape index: {}]
  %s8 = inlined_call_operand.vmem [shape: f32[1,256], index: 8, kind: input, shape index: {}]
  %s9 = inlined_call_operand.vmem [shape: f32[1,128], index: 9, kind: input, shape index: {}]
  %s10 = inlined_call_operand.vmem [shape: f32[1,128], index: 10, kind: input, shape index: {}]
  %s11 = inlined_call_operand.hbm [shape: bf16[128,128], index: 11, kind: input, shape index: {}]
  %s12 = inlined_call_operand.vmem [shape: f32[1,128], index: 12, kind: input, shape index: {}]
  %s13 = inlined_call_operand.hbm [shape: f32[128,128], index: 13, kind: input, shape index: {}]
  %s14 = inlined_call_operand.vmem [shape: f32[8,128], index: 14, kind: output, shape index: {}]
  %s15 = sld [smem:[#allocation0]]
  $region90: #{gru_generator_forward.1} parent=0
    _
  %s17 = ssub.s32 1, %s15
  %s18 = scalar_select 0, %s17, %s15
  $region1: #{gru_generator_forward.1} parent=0
    #allocation3 [shape = 'u8[98304]{0}', space=vmem, size = 0x18000, scoped, tag = 'input window, operand 1, single buffered']
    #allocation4 [shape = 's32[1]{0}', space=sflag, size = 0x4, scoped, tag = 'scoped memory for gru_generator_forward.1']
    #allocation5 [shape = 'u8[98304]{0}', space=vmem, size = 0x18000, scoped, tag = 'input window, operand 2, single buffered']
    #allocation6 [shape = 's32[1]{0}', space=sflag, size = 0x4, scoped, tag = 'scoped memory for gru_generator_forward.1']
    #allocation7 [shape = 'u8[98304]{0}', space=vmem, size = 0x18000, scoped, tag = 'input window, operand 6, single buffered']
    #allocation8 [shape = 'u8[98304]{0}', space=vmem, size = 0x18000, scoped, tag = 'input window, operand 7, single buffered']
    #allocation9 [shape = 's32[1]{0}', space=sflag, size = 0x4, scoped, tag = 'scoped memory for gru_generator_forward.1']
    #allocation10 [shape = 'u8[32768]{0}', space=vmem, size = 0x8000, scoped, tag = 'input window, operand 11, single buffered']
    #allocation11 [shape = 'u8[65536]{0}', space=vmem, size = 0x10000, scoped, tag = 'input window, operand 13, single buffered']
    #allocation12 [shape = 's32[1]{0}', space=sflag, size = 0x4, scoped, tag = 'scoped memory for gru_generator_forward.1']
    %19 = vsyncpa [#allocation4], 0
    %20 = vsyncpa [#allocation6], 0
    %21 = vsyncpa [#allocation9], 0
    %22 = vsyncpa [#allocation12], 0
    // Predicated region
    $region2: #{gru_generator_forward.1} parent=1 // pred_check
      _
    $region3: #{gru_generator_forward.1} parent=1 // pred_check_branch
      %24 = sbr.rel (0) target = $region5
    $region4: #{gru_generator_forward.1} parent=1 // pred_region
      _
    $region5: #{gru_generator_forward.1} parent=1 // pred_fallthru
      _
    // Predicated region
    $region6: #{gru_generator_forward.1} parent=1 // pred_check
      _
    $region7: #{gru_generator_forward.1} parent=1 // pred_check_branch
      %26 = sbr.rel (0) target = $region9
    $region8: #{gru_generator_forward.1} parent=1 // pred_region
      %s28 = ssub.s32 3072, 3072
      %29 = vsyncadd [#allocation4], %s28
      %s30 = sshll.u32 [#allocation3], 4
      %s31 = int_to_ptr.vmem [resolvable:$true] %s30
      %36 = dma.hbm_to_vmem [thread:$0]  %s1, 3072, %s31, [#allocation4], 192, 192, 12
    $region9: #{gru_generator_forward.1} parent=1 // pred_fallthru
      _
    // Predicated region
    $region10: #{gru_generator_forward.1} parent=1 // pred_check
      _
    $region11: #{gru_generator_forward.1} parent=1 // pred_check_branch
      %38 = sbr.rel (0) target = $region13
    $region12: #{gru_generator_forward.1} parent=1 // pred_region
      %s40 = ssub.s32 3072, 3072
      %41 = vsyncadd [#allocation6], %s40
      %s42 = sshll.u32 [#allocation5], 4
      %s43 = int_to_ptr.vmem [resolvable:$true] %s42
      %48 = dma.hbm_to_vmem [thread:$0]  %s2, 3072, %s43, [#allocation6], 192, 192, 12
    $region13: #{gru_generator_forward.1} parent=1 // pred_fallthru
      _
    // Predicated region
    $region14: #{gru_generator_forward.1} parent=1 // pred_check
      _
    $region15: #{gru_generator_forward.1} parent=1 // pred_check_branch
      %50 = sbr.rel (0) target = $region17
    $region16: #{gru_generator_forward.1} parent=1 // pred_region
      _
    $region17: #{gru_generator_forward.1} parent=1 // pred_fallthru
      _
    // Predicated region
    $region18: #{gru_generator_forward.1} parent=1 // pred_check
      _
    $region19: #{gru_generator_forward.1} parent=1 // pred_check_branch
      %52 = sbr.rel (0) target = $region21
    $region20: #{gru_generator_forward.1} parent=1 // pred_region
      _
    $region21: #{gru_generator_forward.1} parent=1 // pred_fallthru
      _
    // Predicated region
    $region22: #{gru_generator_forward.1} parent=1 // pred_check
      _
    $region23: #{gru_generator_forward.1} parent=1 // pred_check_branch
      %54 = sbr.rel (0) target = $region25
    $region24: #{gru_generator_forward.1} parent=1 // pred_region
      _
    $region25: #{gru_generator_forward.1} parent=1 // pred_fallthru
      _
    // Predicated region
    $region26: #{gru_generator_forward.1} parent=1 // pred_check
      _
    $region27: #{gru_generator_forward.1} parent=1 // pred_check_branch
      %56 = sbr.rel (0) target = $region29
    $region28: #{gru_generator_forward.1} parent=1 // pred_region
      %s58 = ssub.s32 3072, 3072
      %59 = vsyncadd [#allocation6], %s58
      %s60 = sshll.u32 [#allocation7], 4
      %s61 = int_to_ptr.vmem [resolvable:$true] %s60
      %66 = dma.hbm_to_vmem [thread:$0]  %s6, 3072, %s61, [#allocation6], 192, 192, 12
    $region29: #{gru_generator_forward.1} parent=1 // pred_fallthru
      _
    // Predicated region
    $region30: #{gru_generator_forward.1} parent=1 // pred_check
      _
    $region31: #{gru_generator_forward.1} parent=1 // pred_check_branch
      %68 = sbr.rel (0) target = $region33
    $region32: #{gru_generator_forward.1} parent=1 // pred_region
      %s70 = ssub.s32 3072, 3072
      %71 = vsyncadd [#allocation9], %s70
      %s72 = sshll.u32 [#allocation8], 4
      %s73 = int_to_ptr.vmem [resolvable:$true] %s72
      %78 = dma.hbm_to_vmem [thread:$0]  %s7, 3072, %s73, [#allocation9], 192, 192, 12
    $region33: #{gru_generator_forward.1} parent=1 // pred_fallthru
      _
    // Predicated region
    $region34: #{gru_generator_forward.1} parent=1 // pred_check
      _
    $region35: #{gru_generator_forward.1} parent=1 // pred_check_branch
      %80 = sbr.rel (0) target = $region37
    $region36: #{gru_generator_forward.1} parent=1 // pred_region
      _
    $region37: #{gru_generator_forward.1} parent=1 // pred_fallthru
      _
    // Predicated region
    $region38: #{gru_generator_forward.1} parent=1 // pred_check
      _
    $region39: #{gru_generator_forward.1} parent=1 // pred_check_branch
      %82 = sbr.rel (0) target = $region41
    $region40: #{gru_generator_forward.1} parent=1 // pred_region
      _
    $region41: #{gru_generator_forward.1} parent=1 // pred_fallthru
      _
    // Predicated region
    $region42: #{gru_generator_forward.1} parent=1 // pred_check
      _
    $region43: #{gru_generator_forward.1} parent=1 // pred_check_branch
      %84 = sbr.rel (0) target = $region45
    $region44: #{gru_generator_forward.1} parent=1 // pred_region
      _
    $region45: #{gru_generator_forward.1} parent=1 // pred_fallthru
      _
    // Predicated region
    $region46: #{gru_generator_forward.1} parent=1 // pred_check
      _
    $region47: #{gru_generator_forward.1} parent=1 // pred_check_branch
      %86 = sbr.rel (0) target = $region49
    $region48: #{gru_generator_forward.1} parent=1 // pred_region
      %s88 = ssub.s32 1024, 1024
      %89 = vsyncadd [#allocation9], %s88
      %s90 = sshll.u32 [#allocation10], 4
      %s91 = int_to_ptr.vmem [resolvable:$true] %s90
      %96 = dma.hbm_to_vmem [thread:$0]  %s11, 1024, %s91, [#allocation9], 64, 64, 4
    $region49: #{gru_generator_forward.1} parent=1 // pred_fallthru
      _
    // Predicated region
    $region50: #{gru_generator_forward.1} parent=1 // pred_check
      _
    $region51: #{gru_generator_forward.1} parent=1 // pred_check_branch
      %98 = sbr.rel (0) target = $region53
    $region52: #{gru_generator_forward.1} parent=1 // pred_region
      _
    $region53: #{gru_generator_forward.1} parent=1 // pred_fallthru
      _
    // Predicated region
    $region54: #{gru_generator_forward.1} parent=1 // pred_check
      _
    $region55: #{gru_generator_forward.1} parent=1 // pred_check_branch
      %100 = sbr.rel (0) target = $region57
    $region56: #{gru_generator_forward.1} parent=1 // pred_region
      %s102 = ssub.s32 2048, 2048
      %103 = vsyncadd [#allocation12], %s102
      %s104 = sshll.u32 [#allocation11], 4
      %s105 = int_to_ptr.vmem [resolvable:$true] %s104
      %110 = dma.hbm_to_vmem [thread:$0]  %s13, 2048, %s105, [#allocation12], 128, 128, 8
    $region57: #{gru_generator_forward.1} parent=1 // pred_fallthru
      _
    // Predicated region
    $region58: #{gru_generator_forward.1} parent=1 // pred_check
      _
    $region59: #{gru_generator_forward.1} parent=1 // pred_check_branch
      %112 = sbr.rel (0) target = $region61
    $region60: #{gru_generator_forward.1} parent=1 // pred_region
      %113 = dma.done [#allocation4], 3072
    $region61: #{gru_generator_forward.1} parent=1 // pred_fallthru
      _
    // Predicated region
    $region62: #{gru_generator_forward.1} parent=1 // pred_check
      _
    $region63: #{gru_generator_forward.1} parent=1 // pred_check_branch
      %115 = sbr.rel (0) target = $region65
    $region64: #{gru_generator_forward.1} parent=1 // pred_region
      %116 = dma.done [#allocation6], 3072
    $region65: #{gru_generator_forward.1} parent=1 // pred_fallthru
      _
    // Predicated region
    $region66: #{gru_generator_forward.1} parent=1 // pred_check
      _
    $region67: #{gru_generator_forward.1} parent=1 // pred_check_branch
      %118 = sbr.rel (0) target = $region69
    $region68: #{gru_generator_forward.1} parent=1 // pred_region
      %119 = dma.done [#allocation6], 3072
    $region69: #{gru_generator_forward.1} parent=1 // pred_fallthru
      _
    // Predicated region
    $region70: #{gru_generator_forward.1} parent=1 // pred_check
      _
    $region71: #{gru_generator_forward.1} parent=1 // pred_check_branch
      %121 = sbr.rel (0) target = $region73
    $region72: #{gru_generator_forward.1} parent=1 // pred_region
      %122 = dma.done [#allocation9], 3072
    $region73: #{gru_generator_forward.1} parent=1 // pred_fallthru
      _
    // Predicated region
    $region74: #{gru_generator_forward.1} parent=1 // pred_check
      _
    $region75: #{gru_generator_forward.1} parent=1 // pred_check_branch
      %124 = sbr.rel (0) target = $region77
    $region76: #{gru_generator_forward.1} parent=1 // pred_region
      %125 = dma.done [#allocation9], 1024
    $region77: #{gru_generator_forward.1} parent=1 // pred_fallthru
      _
    // Predicated region
    $region78: #{gru_generator_forward.1} parent=1 // pred_check
      _
    $region79: #{gru_generator_forward.1} parent=1 // pred_check_branch
      %127 = sbr.rel (0) target = $region81
    $region80: #{gru_generator_forward.1} parent=1 // pred_region
      %128 = dma.done [#allocation12], 2048
    $region81: #{gru_generator_forward.1} parent=1 // pred_fallthru
      _
    %v130 = vld [vmem:[%s0] sm:$0xf]
    %v131 = vld [vmem:[#allocation3] sm:$0xff]
    %v132 = vld [vmem:[#allocation3 + $0x8] sm:$0xf]
    %v133 = vld [vmem:[#allocation3 + $0xc] sm:$0xff]
    %v134 = vld [vmem:[#allocation3 + $0x14] sm:$0xf]
    %v135 = vld [vmem:[#allocation3 + $0x18] sm:$0xff]
    %v136 = vld [vmem:[#allocation3 + $0x20] sm:$0xf]
    %v137 = vld [vmem:[#allocation3 + $0x24] sm:$0xff]
    %v138 = vld [vmem:[#allocation3 + $0x2c] sm:$0xf]
    %v139 = vld [vmem:[#allocation3 + $0x30] sm:$0xff]
    %v140 = vld [vmem:[#allocation3 + $0x38] sm:$0xf]
    %v141 = vld [vmem:[#allocation3 + $0x3c] sm:$0xff]
    %v142 = vld [vmem:[#allocation3 + $0x44] sm:$0xf]
    %v143 = vld [vmem:[#allocation3 + $0x48] sm:$0xff]
    %v144 = vld [vmem:[#allocation3 + $0x50] sm:$0xf]
    %v145 = vld [vmem:[#allocation3 + $0x54] sm:$0xff]
    %v146 = vld [vmem:[#allocation3 + $0x5c] sm:$0xf]
    %v147 = vld [vmem:[#allocation3 + $0x60] sm:$0xff]
    %v148 = vld [vmem:[#allocation3 + $0x68] sm:$0xf]
    %v149 = vld [vmem:[#allocation3 + $0x6c] sm:$0xff]
    %v150 = vld [vmem:[#allocation3 + $0x74] sm:$0xf]
    %v151 = vld [vmem:[#allocation3 + $0x78] sm:$0xff]
    %v152 = vld [vmem:[#allocation3 + $0x80] sm:$0xf]
    %v153 = vld [vmem:[#allocation3 + $0x84] sm:$0xff]
    %v154 = vld [vmem:[#allocation3 + $0x8c] sm:$0xf]
    %v155 = vld [vmem:[#allocation3 + $0x90] sm:$0xff]
    %v156 = vld [vmem:[#allocation3 + $0x98] sm:$0xf]
    %v157 = vld [vmem:[#allocation3 + $0x9c] sm:$0xff]
    %v158 = vld [vmem:[#allocation3 + $0xa4] sm:$0xf]
    %v159 = vld [vmem:[#allocation3 + $0xa8] sm:$0xff]
    %v160 = vld [vmem:[#allocation3 + $0xb0] sm:$0xf]
    %v161 = vld [vmem:[#allocation3 + $0xb4] sm:$0xff]
    %v162 = vld [vmem:[#allocation3 + $0xbc] sm:$0xf]
    %v195 = vunpack.c.l.b16 %v131
    %v196 = vunpack.c.h.b16 %v131
    %v197 = vunpack.c.l.b16 %v132
    %v198 = vunpack.c.l.b16 %v133
    %v199 = vunpack.c.h.b16 %v133
    %v200 = vunpack.c.l.b16 %v134
    %v201 = vunpack.c.l.b16 %v135
    %v202 = vunpack.c.h.b16 %v135
    %v203 = vunpack.c.l.b16 %v136
    %v204 = vunpack.c.l.b16 %v137
    %v205 = vunpack.c.h.b16 %v137
    %v206 = vunpack.c.l.b16 %v138
    %v207 = vunpack.c.l.b16 %v139
    %v208 = vunpack.c.h.b16 %v139
    %v209 = vunpack.c.l.b16 %v140
    %v210 = vunpack.c.l.b16 %v141
    %v211 = vunpack.c.h.b16 %v141
    %v212 = vunpack.c.l.b16 %v142
    %v213 = vunpack.c.l.b16 %v143
    %v214 = vunpack.c.h.b16 %v143
    %v215 = vunpack.c.l.b16 %v144
    %v216 = vunpack.c.l.b16 %v145
    %v217 = vunpack.c.h.b16 %v145
    %v218 = vunpack.c.l.b16 %v146
    %v219 = vunpack.c.l.b16 %v147
    %v220 = vunpack.c.h.b16 %v147
    %v221 = vunpack.c.l.b16 %v148
    %v222 = vunpack.c.l.b16 %v149
    %v223 = vunpack.c.h.b16 %v149
    %v224 = vunpack.c.l.b16 %v150
    %v225 = vunpack.c.l.b16 %v151
    %v226 = vunpack.c.h.b16 %v151
    %v227 = vunpack.c.l.b16 %v152
    %v228 = vunpack.c.l.b16 %v153
    %v229 = vunpack.c.h.b16 %v153
    %v230 = vunpack.c.l.b16 %v154
    %v231 = vunpack.c.l.b16 %v155
    %v232 = vunpack.c.h.b16 %v155
    %v233 = vunpack.c.l.b16 %v156
    %v234 = vunpack.c.l.b16 %v157
    %v235 = vunpack.c.h.b16 %v157
    %v236 = vunpack.c.l.b16 %v158
    %v237 = vunpack.c.l.b16 %v159
    %v238 = vunpack.c.h.b16 %v159
    %v239 = vunpack.c.l.b16 %v160
    %v240 = vunpack.c.l.b16 %v161
    %v241 = vunpack.c.h.b16 %v161
    %v242 = vunpack.c.l.b16 %v162
    %v243 = vpack.c.b16 %v198, %v195
    %v244 = vpack.c.b16 %v199, %v196
    %v245 = vpack.c.b16 %v200, %v197
    %v246 = vpack.c.b16 %v204, %v201
    %v247 = vpack.c.b16 %v205, %v202
    %v248 = vpack.c.b16 %v206, %v203
    %v249 = vpack.c.b16 %v210, %v207
    %v250 = vpack.c.b16 %v211, %v208
    %v251 = vpack.c.b16 %v212, %v209
    %v252 = vpack.c.b16 %v216, %v213
    %v253 = vpack.c.b16 %v217, %v214
    %v254 = vpack.c.b16 %v218, %v215
    %v255 = vpack.c.b16 %v222, %v219
    %v256 = vpack.c.b16 %v223, %v220
    %v257 = vpack.c.b16 %v224, %v221
    %v258 = vpack.c.b16 %v228, %v225
    %v259 = vpack.c.b16 %v229, %v226
    %v260 = vpack.c.b16 %v230, %v227
    %v261 = vpack.c.b16 %v234, %v231
    %v262 = vpack.c.b16 %v235, %v232
    %v263 = vpack.c.b16 %v236, %v233
    %v264 = vpack.c.b16 %v240, %v237
    %v265 = vpack.c.b16 %v241, %v238
    %v266 = vpack.c.b16 %v242, %v239
    %291 = vmatprep.subr.bf16.mxu0 %v244
    %292 = vmatpush1.bf16.msra.mxu0 %v243
    %293 = vmatprep.subr.bf16.mxu0 %v247
    %294 = vmatpush1.bf16.msra.mxu0 %v246
    %295 = vmatprep.subr.bf16.mxu0 %v250
    %296 = vmatpush1.bf16.msra.mxu0 %v249
    %297 = vmatprep.subr.bf16.mxu0 %v253
    %298 = vmatpush1.bf16.msra.mxu0 %v252
    %299 = vmatprep.subr.bf16.mxu0 %v256
    %300 = vmatpush1.bf16.msra.mxu0 %v255
    %301 = vmatprep.subr.bf16.mxu0 %v259
    %302 = vmatpush1.bf16.msra.mxu0 %v258
    %303 = vmatprep.subr.bf16.mxu0 %v262
    %304 = vmatpush1.bf16.msra.mxu0 %v261
    %305 = vmatprep.subr.bf16.mxu0 %v265
    %306 = vmatpush1.bf16.msra.mxu0 %v264
    %307 = vmatprep.subr.bf16.mxu0 0
    %308 = vmatpush1.bf16.msra.mxu0 0
    %309 = vmatprep.subr.bf16.mxu0 0
    %310 = vmatpush1.bf16.msra.mxu0 0
    %311 = vmatprep.subr.bf16.mxu0 0
    %312 = vmatpush1.bf16.msra.mxu0 0
    %313 = vmatprep.subr.bf16.mxu0 0
    %314 = vmatpush1.bf16.msra.mxu0 0
    %315 = vmatprep.subr.bf16.mxu0 0
    %316 = vmatpush1.bf16.msra.mxu0 0
    %317 = vmatprep.subr.bf16.mxu0 0
    %318 = vmatpush1.bf16.msra.mxu0 0
    %319 = vmatprep.subr.bf16.mxu0 0
    %320 = vmatpush1.bf16.msra.mxu0 0
    %321 = vmatprep.subr.bf16.mxu0 0
    %322 = vmatpush1.bf16.msra.mxu0 0
    %323 = vmatprep.mubr.bf16.mxu0 0
    %324 = vmatmul.mubr.bf16.gmra.mrb[0].mxu0 %v130
    %v325 = vpop.f32.mrb[0].mxu0
    %v326 = vadd.f32 0.0, %v325
    %v327 = vpop.f32.mrb[0].mxu0
    %v328 = vadd.f32 0.0, %v327
    %v329 = vpop.f32.mrb[0].mxu0
    %v330 = vpop.f32.mrb[0].mxu0
    %331 = vdwg.mxu0
    %332 = vmatprep.subr.bf16.mxu0 0
    %333 = vmatpush1.bf16.msra.mxu0 %v245
    %334 = vmatprep.subr.bf16.mxu0 0
    %335 = vmatpush1.bf16.msra.mxu0 %v248
    %336 = vmatprep.subr.bf16.mxu0 0
    %337 = vmatpush1.bf16.msra.mxu0 %v251
    %338 = vmatprep.subr.bf16.mxu0 0
    %339 = vmatpush1.bf16.msra.mxu0 %v254
    %340 = vmatprep.subr.bf16.mxu0 0
    %341 = vmatpush1.bf16.msra.mxu0 %v257
    %342 = vmatprep.subr.bf16.mxu0 0
    %343 = vmatpush1.bf16.msra.mxu0 %v260
    %344 = vmatprep.subr.bf16.mxu0 0
    %345 = vmatpush1.bf16.msra.mxu0 %v263
    %346 = vmatprep.subr.bf16.mxu0 0
    %347 = vmatpush1.bf16.msra.mxu0 %v266
    %348 = vmatprep.subr.bf16.mxu0 0
    %349 = vmatpush1.bf16.msra.mxu0 0
    %350 = vmatprep.subr.bf16.mxu0 0
    %351 = vmatpush1.bf16.msra.mxu0 0
    %352 = vmatprep.subr.bf16.mxu0 0
    %353 = vmatpush1.bf16.msra.mxu0 0
    %354 = vmatprep.subr.bf16.mxu0 0
    %355 = vmatpush1.bf16.msra.mxu0 0
    %356 = vmatprep.subr.bf16.mxu0 0
    %357 = vmatpush1.bf16.msra.mxu0 0
    %358 = vmatprep.subr.bf16.mxu0 0
    %359 = vmatpush1.bf16.msra.mxu0 0
    %360 = vmatprep.subr.bf16.mxu0 0
    %361 = vmatpush1.bf16.msra.mxu0 0
    %362 = vmatprep.subr.bf16.mxu0 0
    %363 = vmatpush1.bf16.msra.mxu0 0
    %364 = vmatprep.mubr.bf16.mxu0 0
    %365 = vmatmul.mubr.bf16.gmra.mrb[0].mxu0 %v130
    %v366 = vpop.f32.mrb[0].mxu0
    %v367 = vadd.f32 0.0, %v366
    %v368 = vpop.f32.mrb[0].mxu0
    %v369 = vpop.f32.mrb[0].mxu0
    %v370 = vpop.f32.mrb[0].mxu0
    %371 = vdwg.mxu0
    %v372 = vld [vmem:[%s3] sm:$0x3]
    %v374 = vlaneseq
    %v375 = vshrl.u32 %v374, 7
    %v376 = vsub.s32 0, %v375
    %v377 = vrot.slane %v372, %v376
    %v378 = vlaneseq
    %v379 = vshrl.u32 %v378, 7
    %v380 = vsub.s32 1, %v379
    %v381 = vrot.slane %v372, %v380
    %v384 = vadd.f32 %v326, %v377
    %v385 = vadd.f32 %v328, %v381
    %v386 = vxor.u32 %v384, 2147483648
    %v387 = vxor.u32 %v385, 2147483648
    %v388 = vmul.f32 %v386, 1.442695
    %v389 = vpow.pop %v388
    %v390 = vmul.f32 %v387, 1.442695
    %v391 = vpow.pop %v390
    %v392 = vadd.f32 %v389, 1.0
    %v393 = vadd.f32 %v391, 1.0
    %v394 = vrcp.pop %v392
    %v395 = vmul.f32 1.0, %v394
    %v396 = vrcp.pop %v393
    %v397 = vmul.f32 1.0, %v396
    %v398 = vld [vmem:[%s4] sm:$0x1]
    %v400 = vlaneseq
    %v401 = vshrl.u32 %v400, 7
    %v402 = vsub.s32 0, %v401
    %v403 = vrot.slane %v398, %v402
    %v405 = vadd.f32 %v367, %v403
    %v406 = vld [vmem:[%s5] sm:$0x1]
    %v408 = vlaneseq
    %v409 = vshrl.u32 %v408, 7
    %v410 = vsub.s32 0, %v409
    %v411 = vrot.slane %v406, %v410
    %v413 = vmul.f32 %v395, %v411
    %v414 = vadd.f32 %v405, %v413
    %v415 = vtanh.pop %v414
    %v416 = vsub.f32 1.0, %v397
    %v417 = vmul.f32 %v416, %v415
    %v418 = vpack.c.bf16 %v417, %v417
    %v419 = vld [vmem:[#allocation7] sm:$0xff]
    %v420 = vld [vmem:[#allocation7 + $0x8] sm:$0xf]
    %v421 = vld [vmem:[#allocation7 + $0xc] sm:$0xff]
    %v422 = vld [vmem:[#allocation7 + $0x14] sm:$0xf]
    %v423 = vld [vmem:[#allocation7 + $0x18] sm:$0xff]
    %v424 = vld [vmem:[#allocation7 + $0x20] sm:$0xf]
    %v425 = vld [vmem:[#allocation7 + $0x24] sm:$0xff]
    %v426 = vld [vmem:[#allocation7 + $0x2c] sm:$0xf]
    %v427 = vld [vmem:[#allocation7 + $0x30] sm:$0xff]
    %v428 = vld [vmem:[#allocation7 + $0x38] sm:$0xf]
    %v429 = vld [vmem:[#allocation7 + $0x3c] sm:$0xff]
    %v430 = vld [vmem:[#allocation7 + $0x44] sm:$0xf]
    %v431 = vld [vmem:[#allocation7 + $0x48] sm:$0xff]
    %v432 = vld [vmem:[#allocation7 + $0x50] sm:$0xf]
    %v433 = vld [vmem:[#allocation7 + $0x54] sm:$0xff]
    %v434 = vld [vmem:[#allocation7 + $0x5c] sm:$0xf]
    %v435 = vld [vmem:[#allocation7 + $0x60] sm:$0xff]
    %v436 = vld [vmem:[#allocation7 + $0x68] sm:$0xf]
    %v437 = vld [vmem:[#allocation7 + $0x6c] sm:$0xff]
    %v438 = vld [vmem:[#allocation7 + $0x74] sm:$0xf]
    %v439 = vld [vmem:[#allocation7 + $0x78] sm:$0xff]
    %v440 = vld [vmem:[#allocation7 + $0x80] sm:$0xf]
    %v441 = vld [vmem:[#allocation7 + $0x84] sm:$0xff]
    %v442 = vld [vmem:[#allocation7 + $0x8c] sm:$0xf]
    %v443 = vld [vmem:[#allocation7 + $0x90] sm:$0xff]
    %v444 = vld [vmem:[#allocation7 + $0x98] sm:$0xf]
    %v445 = vld [vmem:[#allocation7 + $0x9c] sm:$0xff]
    %v446 = vld [vmem:[#allocation7 + $0xa4] sm:$0xf]
    %v447 = vld [vmem:[#allocation7 + $0xa8] sm:$0xff]
    %v448 = vld [vmem:[#allocation7 + $0xb0] sm:$0xf]
    %v449 = vld [vmem:[#allocation7 + $0xb4] sm:$0xff]
    %v450 = vld [vmem:[#allocation7 + $0xbc] sm:$0xf]
    %v483 = vunpack.c.l.b16 %v419
    %v484 = vunpack.c.h.b16 %v419
    %v485 = vunpack.c.l.b16 %v420
    %v486 = vunpack.c.l.b16 %v421
    %v487 = vunpack.c.h.b16 %v421
    %v488 = vunpack.c.l.b16 %v422
    %v489 = vunpack.c.l.b16 %v423
    %v490 = vunpack.c.h.b16 %v423
    %v491 = vunpack.c.l.b16 %v424
    %v492 = vunpack.c.l.b16 %v425
    %v493 = vunpack.c.h.b16 %v425
    %v494 = vunpack.c.l.b16 %v426
    %v495 = vunpack.c.l.b16 %v427
    %v496 = vunpack.c.h.b16 %v427
    %v497 = vunpack.c.l.b16 %v428
    %v498 = vunpack.c.l.b16 %v429
    %v499 = vunpack.c.h.b16 %v429
    %v500 = vunpack.c.l.b16 %v430
    %v501 = vunpack.c.l.b16 %v431
    %v502 = vunpack.c.h.b16 %v431
    %v503 = vunpack.c.l.b16 %v432
    %v504 = vunpack.c.l.b16 %v433
    %v505 = vunpack.c.h.b16 %v433
    %v506 = vunpack.c.l.b16 %v434
    %v507 = vunpack.c.l.b16 %v435
    %v508 = vunpack.c.h.b16 %v435
    %v509 = vunpack.c.l.b16 %v436
    %v510 = vunpack.c.l.b16 %v437
    %v511 = vunpack.c.h.b16 %v437
    %v512 = vunpack.c.l.b16 %v438
    %v513 = vunpack.c.l.b16 %v439
    %v514 = vunpack.c.h.b16 %v439
    %v515 = vunpack.c.l.b16 %v440
    %v516 = vunpack.c.l.b16 %v441
    %v517 = vunpack.c.h.b16 %v441
    %v518 = vunpack.c.l.b16 %v442
    %v519 = vunpack.c.l.b16 %v443
    %v520 = vunpack.c.h.b16 %v443
    %v521 = vunpack.c.l.b16 %v444
    %v522 = vunpack.c.l.b16 %v445
    %v523 = vunpack.c.h.b16 %v445
    %v524 = vunpack.c.l.b16 %v446
    %v525 = vunpack.c.l.b16 %v447
    %v526 = vunpack.c.h.b16 %v447
    %v527 = vunpack.c.l.b16 %v448
    %v528 = vunpack.c.l.b16 %v449
    %v529 = vunpack.c.h.b16 %v449
    %v530 = vunpack.c.l.b16 %v450
    %v531 = vpack.c.b16 %v486, %v483
    %v532 = vpack.c.b16 %v487, %v484
    %v533 = vpack.c.b16 %v488, %v485
    %v534 = vpack.c.b16 %v492, %v489
    %v535 = vpack.c.b16 %v493, %v490
    %v536 = vpack.c.b16 %v494, %v491
    %v537 = vpack.c.b16 %v498, %v495
    %v538 = vpack.c.b16 %v499, %v496
    %v539 = vpack.c.b16 %v500, %v497
    %v540 = vpack.c.b16 %v504, %v501
    %v541 = vpack.c.b16 %v505, %v502
    %v542 = vpack.c.b16 %v506, %v503
    %v543 = vpack.c.b16 %v510, %v507
    %v544 = vpack.c.b16 %v511, %v508
    %v545 = vpack.c.b16 %v512, %v509
    %v546 = vpack.c.b16 %v516, %v513
    %v547 = vpack.c.b16 %v517, %v514
    %v548 = vpack.c.b16 %v518, %v515
    %v549 = vpack.c.b16 %v522, %v519
    %v550 = vpack.c.b16 %v523, %v520
    %v551 = vpack.c.b16 %v524, %v521
    %v552 = vpack.c.b16 %v528, %v525
    %v553 = vpack.c.b16 %v529, %v526
    %v554 = vpack.c.b16 %v530, %v527
    %579 = vmatprep.subr.bf16.mxu0 %v532
    %580 = vmatpush1.bf16.msra.mxu0 %v531
    %581 = vmatprep.subr.bf16.mxu0 %v535
    %582 = vmatpush1.bf16.msra.mxu0 %v534
    %583 = vmatprep.subr.bf16.mxu0 %v538
    %584 = vmatpush1.bf16.msra.mxu0 %v537
    %585 = vmatprep.subr.bf16.mxu0 %v541
    %586 = vmatpush1.bf16.msra.mxu0 %v540
    %587 = vmatprep.subr.bf16.mxu0 %v544
    %588 = vmatpush1.bf16.msra.mxu0 %v543
    %589 = vmatprep.subr.bf16.mxu0 %v547
    %590 = vmatpush1.bf16.msra.mxu0 %v546
    %591 = vmatprep.subr.bf16.mxu0 %v550
    %592 = vmatpush1.bf16.msra.mxu0 %v549
    %593 = vmatprep.subr.bf16.mxu0 %v553
    %594 = vmatpush1.bf16.msra.mxu0 %v552
    %595 = vmatprep.subr.bf16.mxu0 0
    %596 = vmatpush1.bf16.msra.mxu0 0
    %597 = vmatprep.subr.bf16.mxu0 0
    %598 = vmatpush1.bf16.msra.mxu0 0
    %599 = vmatprep.subr.bf16.mxu0 0
    %600 = vmatpush1.bf16.msra.mxu0 0
    %601 = vmatprep.subr.bf16.mxu0 0
    %602 = vmatpush1.bf16.msra.mxu0 0
    %603 = vmatprep.subr.bf16.mxu0 0
    %604 = vmatpush1.bf16.msra.mxu0 0
    %605 = vmatprep.subr.bf16.mxu0 0
    %606 = vmatpush1.bf16.msra.mxu0 0
    %607 = vmatprep.subr.bf16.mxu0 0
    %608 = vmatpush1.bf16.msra.mxu0 0
    %609 = vmatprep.subr.bf16.mxu0 0
    %610 = vmatpush1.bf16.msra.mxu0 0
    %611 = vmatprep.mubr.bf16.mxu0 0
    %612 = vmatmul.mubr.bf16.gmra.mrb[0].mxu0 %v418
    %v613 = vpop.f32.mrb[0].mxu0
    %v614 = vadd.f32 0.0, %v613
    %v615 = vpop.f32.mrb[0].mxu0
    %v616 = vadd.f32 0.0, %v615
    %v617 = vpop.f32.mrb[0].mxu0
    %v618 = vpop.f32.mrb[0].mxu0
    %619 = vdwg.mxu0
    %620 = vmatprep.subr.bf16.mxu0 0
    %621 = vmatpush1.bf16.msra.mxu0 %v533
    %622 = vmatprep.subr.bf16.mxu0 0
    %623 = vmatpush1.bf16.msra.mxu0 %v536
    %624 = vmatprep.subr.bf16.mxu0 0
    %625 = vmatpush1.bf16.msra.mxu0 %v539
    %626 = vmatprep.subr.bf16.mxu0 0
    %627 = vmatpush1.bf16.msra.mxu0 %v542
    %628 = vmatprep.subr.bf16.mxu0 0
    %629 = vmatpush1.bf16.msra.mxu0 %v545
    %630 = vmatprep.subr.bf16.mxu0 0
    %631 = vmatpush1.bf16.msra.mxu0 %v548
    %632 = vmatprep.subr.bf16.mxu0 0
    %633 = vmatpush1.bf16.msra.mxu0 %v551
    %634 = vmatprep.subr.bf16.mxu0 0
    %635 = vmatpush1.bf16.msra.mxu0 %v554
    %636 = vmatprep.subr.bf16.mxu0 0
    %637 = vmatpush1.bf16.msra.mxu0 0
    %638 = vmatprep.subr.bf16.mxu0 0
    %639 = vmatpush1.bf16.msra.mxu0 0
    %640 = vmatprep.subr.bf16.mxu0 0
    %641 = vmatpush1.bf16.msra.mxu0 0
    %642 = vmatprep.subr.bf16.mxu0 0
    %643 = vmatpush1.bf16.msra.mxu0 0
    %644 = vmatprep.subr.bf16.mxu0 0
    %645 = vmatpush1.bf16.msra.mxu0 0
    %646 = vmatprep.subr.bf16.mxu0 0
    %647 = vmatpush1.bf16.msra.mxu0 0
    %648 = vmatprep.subr.bf16.mxu0 0
    %649 = vmatpush1.bf16.msra.mxu0 0
    %650 = vmatprep.subr.bf16.mxu0 0
    %651 = vmatpush1.bf16.msra.mxu0 0
    %652 = vmatprep.mubr.bf16.mxu0 0
    %653 = vmatmul.mubr.bf16.gmra.mrb[0].mxu0 %v418
    %v654 = vpop.f32.mrb[0].mxu0
    %v655 = vadd.f32 0.0, %v654
    %v656 = vpop.f32.mrb[0].mxu0
    %v657 = vpop.f32.mrb[0].mxu0
    %v658 = vpop.f32.mrb[0].mxu0
    %659 = vdwg.mxu0
    %v660 = vld [vmem:[%s8] sm:$0x3]
    %v662 = vlaneseq
    %v663 = vshrl.u32 %v662, 7
    %v664 = vsub.s32 0, %v663
    %v665 = vrot.slane %v660, %v664
    %v666 = vlaneseq
    %v667 = vshrl.u32 %v666, 7
    %v668 = vsub.s32 1, %v667
    %v669 = vrot.slane %v660, %v668
    %v672 = vadd.f32 %v614, %v665
    %v673 = vadd.f32 %v616, %v669
    %v674 = vxor.u32 %v672, 2147483648
    %v675 = vxor.u32 %v673, 2147483648
    %v676 = vmul.f32 %v674, 1.442695
    %v677 = vpow.pop %v676
    %v678 = vmul.f32 %v675, 1.442695
    %v679 = vpow.pop %v678
    %v680 = vadd.f32 %v677, 1.0
    %v681 = vadd.f32 %v679, 1.0
    %v682 = vrcp.pop %v680
    %v683 = vmul.f32 1.0, %v682
    %v684 = vrcp.pop %v681
    %v685 = vmul.f32 1.0, %v684
    %v686 = vld [vmem:[%s9] sm:$0x1]
    %v688 = vlaneseq
    %v689 = vshrl.u32 %v688, 7
    %v690 = vsub.s32 0, %v689
    %v691 = vrot.slane %v686, %v690
    %v693 = vadd.f32 %v655, %v691
    %v694 = vld [vmem:[%s10] sm:$0x1]
    %v696 = vlaneseq
    %v697 = vshrl.u32 %v696, 7
    %v698 = vsub.s32 0, %v697
    %v699 = vrot.slane %v694, %v698
    %v701 = vmul.f32 %v683, %v699
    %v702 = vadd.f32 %v693, %v701
    %v703 = vtanh.pop %v702
    %v704 = vsub.f32 1.0, %v685
    %v705 = vmul.f32 %v704, %v703
    %v706 = vpack.c.bf16 %v705, %v705
    %v707 = vld [vmem:[#allocation10] sm:$0xf]
    %v708 = vld [vmem:[#allocation10 + $0x4] sm:$0xf]
    %v709 = vld [vmem:[#allocation10 + $0x8] sm:$0xf]
    %v710 = vld [vmem:[#allocation10 + $0xc] sm:$0xf]
    %v711 = vld [vmem:[#allocation10 + $0x10] sm:$0xf]
    %v712 = vld [vmem:[#allocation10 + $0x14] sm:$0xf]
    %v713 = vld [vmem:[#allocation10 + $0x18] sm:$0xf]
    %v714 = vld [vmem:[#allocation10 + $0x1c] sm:$0xf]
    %v715 = vld [vmem:[#allocation10 + $0x20] sm:$0xf]
    %v716 = vld [vmem:[#allocation10 + $0x24] sm:$0xf]
    %v717 = vld [vmem:[#allocation10 + $0x28] sm:$0xf]
    %v718 = vld [vmem:[#allocation10 + $0x2c] sm:$0xf]
    %v719 = vld [vmem:[#allocation10 + $0x30] sm:$0xf]
    %v720 = vld [vmem:[#allocation10 + $0x34] sm:$0xf]
    %v721 = vld [vmem:[#allocation10 + $0x38] sm:$0xf]
    %v722 = vld [vmem:[#allocation10 + $0x3c] sm:$0xf]
    %v723 = vld [vmem:[%s12] sm:$0x1]
    %v725 = vlaneseq
    %v726 = vshrl.u32 %v725, 7
    %v727 = vsub.s32 0, %v726
    %v728 = vrot.slane %v723, %v727
    %v746 = vunpack.c.l.b16 %v707
    %v747 = vunpack.c.l.b16 %v708
    %v748 = vunpack.c.l.b16 %v709
    %v749 = vunpack.c.l.b16 %v710
    %v750 = vunpack.c.l.b16 %v711
    %v751 = vunpack.c.l.b16 %v712
    %v752 = vunpack.c.l.b16 %v713
    %v753 = vunpack.c.l.b16 %v714
    %v754 = vunpack.c.l.b16 %v715
    %v755 = vunpack.c.l.b16 %v716
    %v756 = vunpack.c.l.b16 %v717
    %v757 = vunpack.c.l.b16 %v718
    %v758 = vunpack.c.l.b16 %v719
    %v759 = vunpack.c.l.b16 %v720
    %v760 = vunpack.c.l.b16 %v721
    %v761 = vunpack.c.l.b16 %v722
    %v762 = vpack.c.b16 %v747, %v746
    %v763 = vpack.c.b16 %v749, %v748
    %v764 = vpack.c.b16 %v751, %v750
    %v765 = vpack.c.b16 %v753, %v752
    %v766 = vpack.c.b16 %v755, %v754
    %v767 = vpack.c.b16 %v757, %v756
    %v768 = vpack.c.b16 %v759, %v758
    %v769 = vpack.c.b16 %v761, %v760
    %778 = vmatprep.subr.bf16.mxu0 0
    %779 = vmatpush1.bf16.msra.mxu0 %v762
    %780 = vmatprep.subr.bf16.mxu0 0
    %781 = vmatpush1.bf16.msra.mxu0 %v763
    %782 = vmatprep.subr.bf16.mxu0 0
    %783 = vmatpush1.bf16.msra.mxu0 %v764
    %784 = vmatprep.subr.bf16.mxu0 0
    %785 = vmatpush1.bf16.msra.mxu0 %v765
    %786 = vmatprep.subr.bf16.mxu0 0
    %787 = vmatpush1.bf16.msra.mxu0 %v766
    %788 = vmatprep.subr.bf16.mxu0 0
    %789 = vmatpush1.bf16.msra.mxu0 %v767
    %790 = vmatprep.subr.bf16.mxu0 0
    %791 = vmatpush1.bf16.msra.mxu0 %v768
    %792 = vmatprep.subr.bf16.mxu0 0
    %793 = vmatpush1.bf16.msra.mxu0 %v769
    %794 = vmatprep.subr.bf16.mxu0 0
    %795 = vmatpush1.bf16.msra.mxu0 0
    %796 = vmatprep.subr.bf16.mxu0 0
    %797 = vmatpush1.bf16.msra.mxu0 0
    %798 = vmatprep.subr.bf16.mxu0 0
    %799 = vmatpush1.bf16.msra.mxu0 0
    %800 = vmatprep.subr.bf16.mxu0 0
    %801 = vmatpush1.bf16.msra.mxu0 0
    %802 = vmatprep.subr.bf16.mxu0 0
    %803 = vmatpush1.bf16.msra.mxu0 0
    %804 = vmatprep.subr.bf16.mxu0 0
    %805 = vmatpush1.bf16.msra.mxu0 0
    %806 = vmatprep.subr.bf16.mxu0 0
    %807 = vmatpush1.bf16.msra.mxu0 0
    %808 = vmatprep.subr.bf16.mxu0 0
    %809 = vmatpush1.bf16.msra.mxu0 0
    %810 = vmatprep.mubr.bf16.mxu0 0
    %811 = vmatmul.mubr.bf16.gmra.mrb[0].mxu0 %v706
    %v812 = vpop.f32.mrb[0].mxu0
    %v813 = vadd.f32 %v728, %v812
    %v814 = vpop.f32.mrb[0].mxu0
    %v815 = vpop.f32.mrb[0].mxu0
    %v816 = vpop.f32.mrb[0].mxu0
    %817 = vdwg.mxu0
    %818 = vmax.xlane.f32.xlu0 %v813
    %v819 = vpop.xlane.xlu0 %818
    %v820 = vsub.f32 %v813, %v819
    %v821 = vmul.f32 %v820, 1.442695
    %v822 = vpow.pop %v821
    %v823 = vld [vmem:[#allocation11] sm:$0xff]
    %v824 = vld [vmem:[#allocation11 + $0x8] sm:$0xff]
    %v825 = vld [vmem:[#allocation11 + $0x10] sm:$0xff]
    %v826 = vld [vmem:[#allocation11 + $0x18] sm:$0xff]
    %v827 = vld [vmem:[#allocation11 + $0x20] sm:$0xff]
    %v828 = vld [vmem:[#allocation11 + $0x28] sm:$0xff]
    %v829 = vld [vmem:[#allocation11 + $0x30] sm:$0xff]
    %v830 = vld [vmem:[#allocation11 + $0x38] sm:$0xff]
    %v831 = vld [vmem:[#allocation11 + $0x40] sm:$0xff]
    %v832 = vld [vmem:[#allocation11 + $0x48] sm:$0xff]
    %v833 = vld [vmem:[#allocation11 + $0x50] sm:$0xff]
    %v834 = vld [vmem:[#allocation11 + $0x58] sm:$0xff]
    %v835 = vld [vmem:[#allocation11 + $0x60] sm:$0xff]
    %v836 = vld [vmem:[#allocation11 + $0x68] sm:$0xff]
    %v837 = vld [vmem:[#allocation11 + $0x70] sm:$0xff]
    %v838 = vld [vmem:[#allocation11 + $0x78] sm:$0xff]
    %839 = vmatprep.subr.mxu0 0.0
    %840 = vmatpush1.msra.mxu0 %v823
    %841 = vmatprep.subr.mxu0 0.0
    %842 = vmatpush1.msra.mxu0 %v824
    %843 = vmatprep.subr.mxu0 0.0
    %844 = vmatpush1.msra.mxu0 %v825
    %845 = vmatprep.subr.mxu0 0.0
    %846 = vmatpush1.msra.mxu0 %v826
    %847 = vmatprep.subr.mxu0 0.0
    %848 = vmatpush1.msra.mxu0 %v827
    %849 = vmatprep.subr.mxu0 0.0
    %850 = vmatpush1.msra.mxu0 %v828
    %851 = vmatprep.subr.mxu0 0.0
    %852 = vmatpush1.msra.mxu0 %v829
    %853 = vmatprep.subr.mxu0 0.0
    %854 = vmatpush1.msra.mxu0 %v830
    %855 = vmatprep.subr.mxu0 0.0
    %856 = vmatpush1.msra.mxu0 %v831
    %857 = vmatprep.subr.mxu0 0.0
    %858 = vmatpush1.msra.mxu0 %v832
    %859 = vmatprep.subr.mxu0 0.0
    %860 = vmatpush1.msra.mxu0 %v833
    %861 = vmatprep.subr.mxu0 0.0
    %862 = vmatpush1.msra.mxu0 %v834
    %863 = vmatprep.subr.mxu0 0.0
    %864 = vmatpush1.msra.mxu0 %v835
    %865 = vmatprep.subr.mxu0 0.0
    %866 = vmatpush1.msra.mxu0 %v836
    %867 = vmatprep.subr.mxu0 0.0
    %868 = vmatpush1.msra.mxu0 %v837
    %869 = vmatprep.subr.mxu0 0.0
    %870 = vmatpush1.msra.mxu0 %v838
    %871 = vmatprep.subr.mxu0 0.0
    %872 = vmatpush1.msra.mxu0 0.0
    %873 = vmatprep.subr.mxu0 0.0
    %874 = vmatpush1.msra.mxu0 0.0
    %875 = vmatprep.subr.mxu0 0.0
    %876 = vmatpush1.msra.mxu0 0.0
    %877 = vmatprep.subr.mxu0 0.0
    %878 = vmatpush1.msra.mxu0 0.0
    %879 = vmatprep.subr.mxu0 0.0
    %880 = vmatpush1.msra.mxu0 0.0
    %881 = vmatprep.subr.mxu0 0.0
    %882 = vmatpush1.msra.mxu0 0.0
    %883 = vmatprep.subr.mxu0 0.0
    %884 = vmatpush1.msra.mxu0 0.0
    %885 = vmatprep.subr.mxu0 0.0
    %886 = vmatpush1.msra.mxu0 0.0
    %887 = vmatprep.subr.mxu0 0.0
    %888 = vmatpush1.msra.mxu0 0.0
    %889 = vmatprep.subr.mxu0 0.0
    %890 = vmatpush1.msra.mxu0 0.0
    %891 = vmatprep.subr.mxu0 0.0
    %892 = vmatpush1.msra.mxu0 0.0
    %893 = vmatprep.subr.mxu0 0.0
    %894 = vmatpush1.msra.mxu0 0.0
    %895 = vmatprep.subr.mxu0 0.0
    %896 = vmatpush1.msra.mxu0 0.0
    %897 = vmatprep.subr.mxu0 0.0
    %898 = vmatpush1.msra.mxu0 0.0
    %899 = vmatprep.subr.mxu0 0.0
    %900 = vmatpush1.msra.mxu0 0.0
    %901 = vmatprep.subr.mxu0 0.0
    %902 = vmatpush1.msra.mxu0 0.0
    %903 = vmatprep.mubr.f32.mxu0 0.0
    %904 = vmatmul.mubr.f32.gmra.mrb[0].mxu0 %v822
    %v905 = vpop.f32.mrb[0].mxu0
    %v906 = vadd.f32 0.0, %v905
    %v907 = vpop.f32.mrb[0].mxu0
    %908 = vdwg.mxu0
    %v909 = vrcp.pop %v906
    %v910 = vmul.f32 %v906, %v909
    %v911 = vsub.f32 2.0, %v910
    %v912 = vmul.f32 %v909, %v911
    %v913 = vmul.f32 %v822, %v912
    %914 = vst [vmem:[%s14] sm:$0xff] %v913
    // Predicated region
    $region82: #{gru_generator_forward.1} parent=1 // pred_check
      _
    $region83: #{gru_generator_forward.1} parent=1 // pred_check_branch
      %916 = sbr.rel (0) target = $region85
    $region84: #{gru_generator_forward.1} parent=1 // pred_region
      _
    $region85: #{gru_generator_forward.1} parent=1 // pred_fallthru
      _
    // Predicated region
    $region86: #{gru_generator_forward.1} parent=1 // pred_check
      _
    $region87: #{gru_generator_forward.1} parent=1 // pred_check_branch
      %918 = sbr.rel (0) target = $region89
    $region88: #{gru_generator_forward.1} parent=1 // pred_region
      _
    $region89: #{gru_generator_forward.1} parent=1 // pred_fallthru
      _
    %919 = vsyncpa [#allocation4], 1
    %920 = vsyncpa [#allocation6], 1
    %921 = vsyncpa [#allocation9], 1
    %922 = vsyncpa [#allocation12], 1

</llo_original>
